<compile_context>
chip_gen: v5e
topology: v5e:2x2
jax: 0.10.0
libtpu: 0.0.40
codegen_flags: <defaults>
</compile_context>

<pallas_src>
import functools

import jax
import jax.numpy as jnp
from jax.experimental import pallas as pl
from jax.experimental.pallas import tpu as pltpu


def _round_up(x, m):
    return (x + m - 1) // m * m


# ---------------------------------------------------------------------------
# Matmul kernels (MXU): single K/N block, tile over M only.  Optional fused bias.
# ---------------------------------------------------------------------------
def _mm_kernel(a_ref, b_ref, o_ref):
    o_ref[...] = jnp.dot(a_ref[...], b_ref[...],
                         preferred_element_type=jnp.float32).astype(o_ref.dtype)


def _mm_bias_kernel(a_ref, b_ref, bias_ref, o_ref):
    acc = jnp.dot(a_ref[...], b_ref[...], preferred_element_type=jnp.float32)
    o_ref[...] = (acc + bias_ref[...]).astype(o_ref.dtype)


def pallas_matmul(a, b, bias=None, out_dtype=None, tm=512):
    """a: (M, K), b: (K, N).  Whole K and N per block; grid only over M."""
    M, K = a.shape
    K2, N = b.shape
    assert K == K2
    out_dtype = out_dtype or a.dtype

    if M <= tm:
        tm_eff, Mp = M, M          # full-M block: no padding, no 8-row constraint
    else:
        tm_eff = tm
        Mp = _round_up(M, tm_eff)
    a_p = a if Mp == M else jnp.pad(a, ((0, Mp - M), (0, 0)))

    in_specs = [pl.BlockSpec((tm_eff, K), lambda i: (i, 0)),
                pl.BlockSpec((K, N), lambda i: (0, 0))]
    args = [a_p, b]
    kernel = _mm_kernel
    if bias is not None:
        in_specs.append(pl.BlockSpec((1, N), lambda i: (0, 0)))
        args.append(bias.reshape(1, N).astype(jnp.float32))
        kernel = _mm_bias_kernel

    out = pl.pallas_call(
        kernel,
        out_shape=jax.ShapeDtypeStruct((Mp, N), out_dtype),
        grid=(Mp // tm_eff,),
        in_specs=in_specs,
        out_specs=pl.BlockSpec((tm_eff, N), lambda i: (i, 0)),
        compiler_params=pltpu.CompilerParams(dimension_semantics=("parallel",)),
    )(*args)
    return out if Mp == M else out[:M]


# ---------------------------------------------------------------------------
# GroupNorm(num_groups=1) kernels: one-pass stats, fused ReLU6 / residual add.
# ---------------------------------------------------------------------------
def _gn_kernel(x_ref, g_ref, b_ref, o_ref, *, eps, relu6, inv_size):
    x = x_ref[...].astype(jnp.float32)                       # (1, H, W, C)
    mean = jnp.sum(x) * inv_size
    var = jnp.maximum(jnp.sum(x * x) * inv_size - mean * mean, 0.0)
    y = (x - mean) * jax.lax.rsqrt(var + eps) * g_ref[0] + b_ref[0]
    if relu6:
        y = jnp.clip(y, 0.0, 6.0)
    o_ref[...] = y.astype(o_ref.dtype)


def _gn_res_kernel(x_ref, g_ref, b_ref, r_ref, o_ref, *, eps, inv_size):
    x = x_ref[...].astype(jnp.float32)
    mean = jnp.sum(x) * inv_size
    var = jnp.maximum(jnp.sum(x * x) * inv_size - mean * mean, 0.0)
    y = (x - mean) * jax.lax.rsqrt(var + eps) * g_ref[0] + b_ref[0]
    o_ref[...] = (y + r_ref[...].astype(jnp.float32)).astype(o_ref.dtype)


def group_norm(x, gamma, beta, *, relu6, residual=None, eps=1e-5):
    N, H, W, C = x.shape
    inv_size = 1.0 / float(H * W * C)
    g = gamma.reshape(1, C).astype(jnp.float32)
    b = beta.reshape(1, C).astype(jnp.float32)
    x_spec = pl.BlockSpec((1, H, W, C), lambda n: (n, 0, 0, 0))
    v_spec = pl.BlockSpec((1, C), lambda n: (0, 0))
    if residual is None:
        kernel = functools.partial(_gn_kernel, eps=eps, relu6=relu6,
                                   inv_size=inv_size)
        in_specs, args = [x_spec, v_spec, v_spec], (x, g, b)
    else:
        assert not relu6
        kernel = functools.partial(_gn_res_kernel, eps=eps, inv_size=inv_size)
        in_specs, args = [x_spec, v_spec, v_spec, x_spec], (x, g, b, residual)
    return pl.pallas_call(
        kernel,
        out_shape=jax.ShapeDtypeStruct((N, H, W, C), x.dtype),
        grid=(N,),
        in_specs=in_specs,
        out_specs=x_spec,
        compiler_params=pltpu.CompilerParams(dimension_semantics=("parallel",)),
    )(*args)


# ---------------------------------------------------------------------------
# 3x3 depthwise conv: taps are formed in-kernel via static slices.
#   stride 1: one padded sample block per grid step.
#   stride 2: 4 space-to-depth phases per sample (still ~1x the input bytes).
# ---------------------------------------------------------------------------
def _dw_kernel(ph_ref, w_ref, o_ref, *, taps, out_h, out_w):
    w = w_ref[...].astype(jnp.float32)                       # (9, C)
    acc = jnp.zeros((out_h, out_w, o_ref.shape[-1]), jnp.float32)
    for k, (p, r0, c0) in enumerate(taps):                   # static unroll
        t = ph_ref[p, r0:r0 + out_h, c0:c0 + out_w, :].astype(jnp.float32)
        acc = acc + t * w[k]
    o_ref[0] = acc.astype(o_ref.dtype)


def depthwise_conv3x3(x, w_dw, stride):
    """padding=1, groups=C.  w_dw: (9, C) in (ky, kx) row-major tap order."""
    N, H, W, C = x.shape
    Ho = (H - 1) // stride + 1
    Wo = (W - 1) // stride + 1
    xp = jnp.pad(x, ((0, 0), (1, 1), (1, 1), (0, 0)))
    if stride == 1:
        ph = xp                                              # (N, H+2, W+2, C)
        P, Hq, Wq = 1, H + 2, W + 2
        taps = [(0, dy, dx) for dy in range(3) for dx in range(3)]
    else:
        # phase (a, b): ph[a,b][i, j] = xp[2i + a, 2j + b]
        Hq, Wq = Ho + 1, Wo + 1
        phases = []
        for a in (0, 1):
            for b in (0, 1):
                p = xp[:, a::2, b::2, :][:, :Hq, :Wq, :]
                if p.shape[1] < Hq or p.shape[2] < Wq:
                    p = jnp.pad(p, ((0, 0), (0, Hq - p.shape[1]),
                                    (0, Wq - p.shape[2]), (0, 0)))
                phases.append(p)
        ph = jnp.stack(phases, axis=1).reshape(N * 4, Hq, Wq, C)
        P = 4
        taps = [((dy % 2) * 2 + (dx % 2), dy // 2, dx // 2)
                for dy in range(3) for dx in range(3)]

    kernel = functools.partial(_dw_kernel, taps=taps, out_h=Ho, out_w=Wo)
    # TODO(synk): halo-tiled row blocking for very large H*W*C (v7x VMEM headroom).
    return pl.pallas_call(
        kernel,
        out_shape=jax.ShapeDtypeStruct((N, Ho, Wo, C), x.dtype),
        grid=(N,),
        in_specs=[pl.BlockSpec((P, Hq, Wq, C), lambda n: (n, 0, 0, 0)),
                  pl.BlockSpec((9, C), lambda n: (0, 0))],
        out_specs=pl.BlockSpec((1, Ho, Wo, C), lambda n: (n, 0, 0, 0)),
        compiler_params=pltpu.CompilerParams(dimension_semantics=("parallel",)),
    )(ph, w_dw)


# ---------------------------------------------------------------------------
# Global average pool (adaptive_avg_pool2d((1,1)) + flatten).
# ---------------------------------------------------------------------------
def _pool_kernel(x_ref, o_ref):
    o_ref[...] = jnp.mean(x_ref[...].astype(jnp.float32), axis=1).astype(o_ref.dtype)


def global_avg_pool(x):
    N, H, W, C = x.shape
    x2 = x.reshape(N, H * W, C)
    return pl.pallas_call(
        _pool_kernel,
        out_shape=jax.ShapeDtypeStruct((N, C), x.dtype),
    )(x2)


# ---------------------------------------------------------------------------
# Conv helpers built on the matmul kernel.
# ---------------------------------------------------------------------------
def conv1x1(x, w):  # w: (Cin, Cout)
    N, H, W, Cin = x.shape
    y = pallas_matmul(x.reshape(N * H * W, Cin), w, out_dtype=x.dtype)
    return y.reshape(N, H, W, w.shape[1])


def conv3x3_stride2(x, w):  # stem: w (9*Cin, Cout) in (ky, kx, cin) order
    N, H, W, Cin = x.shape
    Ho = (H - 1) // 2 + 1
    Wo = (W - 1) // 2 + 1
    xp = jnp.pad(x, ((0, 0), (1, 1), (1, 1), (0, 0)))
    cols = []
    for dy in range(3):
        for dx in range(3):
            cols.append(xp[:, dy:dy + 2 * (Ho - 1) + 1:2,
                           dx:dx + 2 * (Wo - 1) + 1:2, :])
    cols = jnp.concatenate(cols, axis=-1).reshape(N * Ho * Wo, 9 * Cin)
    y = pallas_matmul(cols, w, out_dtype=x.dtype)
    return y.reshape(N, Ho, Wo, w.shape[1])


# ---------------------------------------------------------------------------
# MobileNetV2 (width_mult=1.0) parameters — deterministic synthetic init (bf16).
# ---------------------------------------------------------------------------
_INVERTED_RESIDUAL_SETTING = [
    # t, c, n, s
    (1, 16, 1, 1),
    (6, 24, 2, 2),
    (6, 32, 3, 2),
    (6, 64, 4, 2),
    (6, 96, 3, 1),
    (6, 160, 3, 2),
    (6, 320, 1, 1),
]
_STEM_CH = 32
_LAST_CH = 1280
_W_DTYPE = jnp.bfloat16


def init_params(key, num_classes):
    keys = iter(jax.random.split(key, 128))
    nk = lambda: next(keys)

    def gn(c):
        return (jnp.ones((c,), jnp.float32), jnp.zeros((c,), jnp.float32))

    params = {
        "stem_w": (jax.random.normal(nk(), (3, 3, 3, _STEM_CH), jnp.float32) * 0.1
                   ).reshape(9 * 3, _STEM_CH).astype(_W_DTYPE),
        "stem_gn": gn(_STEM_CH),
        "blocks": [],
    }
    cin = _STEM_CH
    for t, c, n, s in _INVERTED_RESIDUAL_SETTING:
        for i in range(n):
            stride = s if i == 0 else 1
            hidden = cin * t
            blk = {"stride": stride, "use_res": (stride == 1 and cin == c)}
            if t != 1:
                blk["expand_w"] = (jax.random.normal(nk(), (cin, hidden),
                                                     jnp.float32) * 0.1).astype(_W_DTYPE)
                blk["expand_gn"] = gn(hidden)
            blk["dw_w"] = (jax.random.normal(nk(), (3, 3, hidden), jnp.float32) * 0.1
                           ).reshape(9, hidden).astype(_W_DTYPE)
            blk["dw_gn"] = gn(hidden)
            blk["project_w"] = (jax.random.normal(nk(), (hidden, c), jnp.float32)
                                * 0.1).astype(_W_DTYPE)
            blk["project_gn"] = gn(c)
            params["blocks"].append(blk)
            cin = c
    params["head_w"] = (jax.random.normal(nk(), (cin, _LAST_CH), jnp.float32)
                        * 0.05).astype(_W_DTYPE)
    params["head_gn"] = gn(_LAST_CH)
    params["fc_w"] = (jax.random.normal(nk(), (_LAST_CH, num_classes), jnp.float32)
                      * 0.05).astype(_W_DTYPE)
    params["fc_b"] = jnp.zeros((num_classes,), jnp.float32)
    return params


# ---------------------------------------------------------------------------
# ClientModel.forward
# ---------------------------------------------------------------------------
def forward(params, x_nchw):
    x = jnp.transpose(x_nchw, (0, 2, 3, 1)).astype(jnp.bfloat16)   # NHWC, bf16

    # features[0]: ConvBNReLU(3, 32, stride=2)  (BN swapped to GroupNorm(1, C))
    x = conv3x3_stride2(x, params["stem_w"])
    x = group_norm(x, *params["stem_gn"], relu6=True)

    # features[1:18]: inverted residual blocks
    for blk in params["blocks"]:
        inp = x
        y = x
        if "expand_w" in blk:
            y = conv1x1(y, blk["expand_w"])
            y = group_norm(y, *blk["expand_gn"], relu6=True)
        y = depthwise_conv3x3(y, blk["dw_w"], blk["stride"])
        y = group_norm(y, *blk["dw_gn"], relu6=True)
        y = conv1x1(y, blk["project_w"])
        y = group_norm(y, *blk["project_gn"], relu6=False,
                       residual=inp if blk["use_res"] else None)
        x = y

    # features[18]: ConvBNReLU(320, 1280, kernel=1)
    x = conv1x1(x, params["head_w"])
    x = group_norm(x, *params["head_gn"], relu6=True)

    # adaptive_avg_pool2d((1,1)) + flatten
    x = global_avg_pool(x)                                          # (N, 1280)

    # classifier: Dropout(0.2) identity at inference; Linear with fused bias.
    return pallas_matmul(x, params["fc_w"], bias=params["fc_b"],
                         out_dtype=jnp.float32)


# ---------------------------------------------------------------------------
# Pure-JAX references + lightweight on-device correctness checks.
# ---------------------------------------------------------------------------
def _dw_reference(x, w, stride):
    N, H, W, C = x.shape
    Ho = (H - 1) // stride + 1
    Wo = (W - 1) // stride + 1
    xp = jnp.pad(x, ((0, 0), (1, 1), (1, 1), (0, 0)))
    out = jnp.zeros((N, Ho, Wo, C), jnp.float32)
    k = 0
    for dy in range(3):
        for dx in range(3):
            tap = xp[:, dy:dy + stride * (Ho - 1) + 1:stride,
                     dx:dx + stride * (Wo - 1) + 1:stride, :]
            out = out + tap * w[k]
            k += 1
    return out


def _gn_reference(x, g, b, relu6, residual=None, eps=1e-5):
    xf = x.astype(jnp.float32)
    mean = jnp.mean(xf, axis=(1, 2, 3), keepdims=True)
    var = jnp.mean(jnp.square(xf - mean), axis=(1, 2, 3), keepdims=True)
    y = (xf - mean) * jax.lax.rsqrt(var + eps)
    y = y * g.reshape(1, 1, 1, -1) + b.reshape(1, 1, 1, -1)
    if relu6:
        y = jnp.clip(y, 0.0, 6.0)
    if residual is not None:
        y = y + residual.astype(jnp.float32)
    return y


def _validate(key):
    k1, k2, k3, k4, k5, k6 = jax.random.split(key, 6)
    # matmul (+ fused bias): full-M block path and M-tiled (padded) path.
    for m in (37, 600):
        a = jax.random.normal(k1, (m, 40), jnp.float32).astype(jnp.bfloat16)
        w = jax.random.normal(k2, (40, 72), jnp.float32).astype(jnp.bfloat16)
        bias = jax.random.normal(k3, (72,), jnp.float32)
        got = pallas_matmul(a, w, bias=bias, out_dtype=jnp.float32)
        ref = jnp.dot(a.astype(jnp.float32), w.astype(jnp.float32)) + bias
        assert jnp.allclose(got, ref, atol=5e-2, rtol=5e-2), "matmul mismatch"
    # depthwise conv, stride 1 and 2.
    x = jax.random.normal(k4, (2, 8, 8, 16), jnp.float32).astype(jnp.bfloat16)
    wd = (jax.random.normal(k5, (9, 16), jnp.float32) * 0.3).astype(jnp.bfloat16)
    for s in (1, 2):
        got = depthwise_conv3x3(x, wd, s).astype(jnp.float32)
        ref = _dw_reference(x.astype(jnp.float32), wd.astype(jnp.float32), s)
        assert jnp.allclose(got, ref, atol=5e-2, rtol=5e-2), f"dw s={s} mismatch"
    # group norm (+ fused ReLU6 / residual).
    g = jnp.ones((16,), jnp.float32) * 1.3
    bt = jnp.ones((16,), jnp.float32) * 0.2
    res = jax.random.normal(k6, (2, 8, 8, 16), jnp.float32).astype(jnp.bfloat16)
    got = group_norm(x, g, bt, relu6=True).astype(jnp.float32)
    ref = _gn_reference(x, g, bt, relu6=True)
    assert jnp.allclose(got, ref, atol=6e-2, rtol=6e-2), "gn mismatch"
    got = group_norm(x, g, bt, relu6=False, residual=res).astype(jnp.float32)
    ref = _gn_reference(x, g, bt, relu6=False, residual=res)
    assert jnp.allclose(got, ref, atol=6e-2, rtol=6e-2), "gn+res mismatch"


if __name__ == "__main__":
    key = jax.random.PRNGKey(0)
    pkey, xkey, vkey = jax.random.split(key, 3)

    _validate(vkey)

    num_classes = 10
    params = init_params(pkey, num_classes)
    # Small input consistent with the module's NCHW RGB images.
    x = jax.random.normal(xkey, (2, 3, 32, 32), jnp.float32)

    fwd = jax.jit(lambda inp: forward(params, inp))
    out = jax.block_until_ready(fwd(x))

    assert out.shape == (2, num_classes)
    assert bool(jnp.all(jnp.isfinite(out)))
    print("KERNEL_OK")
</pallas_src>

<mosaic_0001>
module attributes {stable_mosaic.version = 11 : i64} {
  func.func @_mm_bias_kernel(%arg0: i32, %arg1: memref<37x40xbf16, #tpu.memory_space<vmem>>, %arg2: memref<40x72xbf16, #tpu.memory_space<vmem>>, %arg3: memref<1x72xf32, #tpu.memory_space<vmem>>, %arg4: memref<37x72xf32, #tpu.memory_space<vmem>>) attributes {dimension_semantics = [#tpu.dimension_semantics<parallel>], iteration_bounds = array<i64: 1>, scalar_prefetch = 0 : i64, scratch_operands = 0 : i64, tpu.core_type = #tpu.core_type<tc>, window_params = [{transform_indices = @transform_0, window_bounds = array<i64: 37, 40>}, {pipeline_mode = #tpu.pipeline_mode<synchronous>, transform_indices = @transform_1, window_bounds = array<i64: 40, 72>}, {pipeline_mode = #tpu.pipeline_mode<synchronous>, transform_indices = @transform_2, window_bounds = array<i64: 1, 72>}, {transform_indices = @transform_3, window_bounds = array<i64: 37, 72>}]} {
    %c0 = arith.constant 0 : index
    %c0_0 = arith.constant 0 : index
    %0 = vector.load %arg1[%c0, %c0_0] : memref<37x40xbf16, #tpu.memory_space<vmem>>, vector<37x40xbf16>
    %c0_1 = arith.constant 0 : index
    %c0_2 = arith.constant 0 : index
    %1 = vector.load %arg2[%c0_1, %c0_2] : memref<40x72xbf16, #tpu.memory_space<vmem>>, vector<40x72xbf16>
    %cst = arith.constant dense<0.000000e+00> : vector<37x72xf32>
    %2 = tpu.matmul %0, %1, %cst {dimension_numbers = #tpu.dot_dimension_numbers<[1], [0], [0], [1], [0, 0, 1, 1], [], []>} : vector<37x40xbf16>, vector<40x72xbf16>, vector<37x72xf32> -> vector<37x72xf32>
    %c0_3 = arith.constant 0 : index
    %c0_4 = arith.constant 0 : index
    %3 = vector.load %arg3[%c0_3, %c0_4] : memref<1x72xf32, #tpu.memory_space<vmem>>, vector<1x72xf32>
    %4 = vector.broadcast %3 : vector<1x72xf32> to vector<37x72xf32>
    %5 = arith.addf %2, %4 : vector<37x72xf32>
    %c0_5 = arith.constant 0 : index
    %c0_6 = arith.constant 0 : index
    %6 = vector.load %arg4[%c0_5, %c0_6] : memref<37x72xf32, #tpu.memory_space<vmem>>, vector<37x72xf32>
    tpu.vector_store %arg4[%c0_5, %c0_6], %5 {strides = array<i32>} : memref<37x72xf32, #tpu.memory_space<vmem>>, vector<37x72xf32>,
    return
  }
  func.func @transform_0(%arg0: i32) -> (i32, i32) {
    %c0_i32 = arith.constant 0 : i32
    %c0_i32_0 = arith.constant 0 : i32
    return %arg0, %c0_i32 : i32, i32
  }
  func.func @transform_1(%arg0: i32) -> (i32, i32) {
    %c0_i32 = arith.constant 0 : i32
    %c0_i32_0 = arith.constant 0 : i32
    %c0_i32_1 = arith.constant 0 : i32
    return %c0_i32, %c0_i32_0 : i32, i32
  }
  func.func @transform_2(%arg0: i32) -> (i32, i32) {
    %c0_i32 = arith.constant 0 : i32
    %c0_i32_0 = arith.constant 0 : i32
    %c0_i32_1 = arith.constant 0 : i32
    return %c0_i32, %c0_i32_0 : i32, i32
  }
  func.func @transform_3(%arg0: i32) -> (i32, i32) {
    %c0_i32 = arith.constant 0 : i32
    %c0_i32_0 = arith.constant 0 : i32
    return %arg0, %c0_i32 : i32, i32
  }
}

</mosaic_0001>

<llo_original>
// kernel: tpu_custom_call.1
$region0: #{tpu_custom_call.1}
  #allocation0 [shape = 'u32[]', space=smem, size = 0x4, offset = 0x4, fixed_abs, tag = 'smem constant byte address 0x4 - core index']
  #allocation1 [shape = 'u32[72,128]{1,0:T(1,128)}', space=vmem, size = 0x9000, scoped, tag = 'internal scratch']
  %s0 = inlined_call_operand.hbm [shape: bf16[37,40], index: 0, kind: input, shape index: {}]
  %s1 = inlined_call_operand.hbm [shape: bf16[40,72], index: 1, kind: input, shape index: {}]
  %s2 = inlined_call_operand.vmem [shape: f32[1,72], index: 2, kind: input, shape index: {}]
  %s3 = inlined_call_operand.hbm [shape: f32[37,72], index: 3, kind: output, shape index: {}]
  %s4 = sld [smem:[#allocation0]]
  $region30: #{tpu_custom_call.1} parent=0
    _
  %s6 = ssub.s32 1, %s4
  %s7 = scalar_select 0, %s6, %s4
  $region1: #{tpu_custom_call.1} parent=0
    #allocation2 [shape = 'u8[10240]{0}', space=vmem, size = 0x2800, scoped, tag = 'input window, operand 0, single buffered']
    #allocation3 [shape = 's32[1]{0}', space=sflag, size = 0x4, scoped, tag = 'scoped memory for tpu_custom_call.1']
    #allocation4 [shape = 's32[1]{0}', space=sflag, size = 0x4, scoped, tag = 'scoped memory for tpu_custom_call.1']
    #allocation5 [shape = 'u8[10240]{0}', space=vmem, size = 0x2800, scoped, tag = 'input window, operand 1, single buffered']
    #allocation6 [shape = 's32[1]{0}', space=sflag, size = 0x4, scoped, tag = 'scoped memory for tpu_custom_call.1']
    #allocation7 [shape = 'u8[20480]{0}', space=vmem, size = 0x5000, scoped, tag = 'output window, operand 0, single buffered']
    %8 = vsyncpa [#allocation3], 0
    %9 = vsyncpa [#allocation6], 0
    %10 = vsyncpa [#allocation4], 0
    // Predicated region
    $region2: #{tpu_custom_call.1} parent=1 // pred_check
      _
    $region3: #{tpu_custom_call.1} parent=1 // pred_check_branch
      %12 = sbr.rel (0) target = $region5
    $region4: #{tpu_custom_call.1} parent=1 // pred_region
      %14 = vsyncadd [#allocation3], 0
      %s15 = sshll.u32 %s0, 4
      %s16 = int_to_ptr.hbm [resolvable:$true] %s15
      %s17 = sshll.u32 [#allocation2], 4
      %s18 = int_to_ptr.vmem [resolvable:$true] %s17
      %23 = dma.hbm_to_vmem [thread:$0]  %s16, 320, %s18, [#allocation3], 64, 64, 4
    $region5: #{tpu_custom_call.1} parent=1 // pred_fallthru
      _
    // Predicated region
    $region6: #{tpu_custom_call.1} parent=1 // pred_check
      _
    $region7: #{tpu_custom_call.1} parent=1 // pred_check_branch
      %25 = sbr.rel (0) target = $region9
    $region8: #{tpu_custom_call.1} parent=1 // pred_region
      %27 = vsyncadd [#allocation6], 0
      %s28 = sshll.u32 %s1, 4
      %s29 = int_to_ptr.hbm [resolvable:$true] %s28
      %s30 = sshll.u32 [#allocation5], 4
      %s31 = int_to_ptr.vmem [resolvable:$true] %s30
      %36 = dma.hbm_to_vmem [thread:$0]  %s29, 320, %s31, [#allocation6], 64, 64, 4
    $region9: #{tpu_custom_call.1} parent=1 // pred_fallthru
      _
    // Predicated region
    $region10: #{tpu_custom_call.1} parent=1 // pred_check
      _
    $region11: #{tpu_custom_call.1} parent=1 // pred_check_branch
      %38 = sbr.rel (0) target = $region13
    $region12: #{tpu_custom_call.1} parent=1 // pred_region
      _
    $region13: #{tpu_custom_call.1} parent=1 // pred_fallthru
      _
    // Predicated region
    $region14: #{tpu_custom_call.1} parent=1 // pred_check
      _
    $region15: #{tpu_custom_call.1} parent=1 // pred_check_branch
      %40 = sbr.rel (0) target = $region17
    $region16: #{tpu_custom_call.1} parent=1 // pred_region
      %42 = dma.done [#allocation3], 320
    $region17: #{tpu_custom_call.1} parent=1 // pred_fallthru
      _
    // Predicated region
    $region18: #{tpu_custom_call.1} parent=1 // pred_check
      _
    $region19: #{tpu_custom_call.1} parent=1 // pred_check_branch
      %44 = sbr.rel (0) target = $region21
    $region20: #{tpu_custom_call.1} parent=1 // pred_region
      %46 = dma.done [#allocation6], 320
    $region21: #{tpu_custom_call.1} parent=1 // pred_fallthru
      _
    %v48 = vld [vmem:[#allocation2] sm:$0xf]
    %v49 = vld [vmem:[#allocation2 + $0x4] sm:$0xf]
    %v50 = vld [vmem:[#allocation2 + $0x8] sm:$0xf]
    %v51 = vld [vmem:[#allocation2 + $0xc] sm:$0xf]
    %v52 = vld [vmem:[#allocation2 + $0x10] sm:$0x7]
    %v53 = vld [vmem:[#allocation5] sm:$0xf]
    %v54 = vld [vmem:[#allocation5 + $0x4] sm:$0xf]
    %v55 = vld [vmem:[#allocation5 + $0x8] sm:$0xf]
    %v56 = vld [vmem:[#allocation5 + $0xc] sm:$0xf]
    %v57 = vld [vmem:[#allocation5 + $0x10] sm:$0xf]
    %v58 = vld [vmem:[%s2] sm:$0x1]
    %v60 = vperm.slane %v58, 0
    %v67 = vunpack.c.l.b16 %v48
    %v68 = vunpack.c.l.b16 %v49
    %v69 = vunpack.c.l.b16 %v50
    %v70 = vunpack.c.l.b16 %v51
    %v71 = vunpack.c.l.b16 %v52
    %v72 = vpack.c.b16 %v68, %v67
    %v73 = vpack.c.b16 %v70, %v69
    %v74 = vpack.c.b16 %v71, %v71
    %v80 = vunpack.c.l.b16 %v53
    %v81 = vunpack.c.l.b16 %v54
    %v82 = vunpack.c.l.b16 %v55
    %v83 = vunpack.c.l.b16 %v56
    %v84 = vunpack.c.l.b16 %v57
    %v85 = vpack.c.b16 %v81, %v80
    %v86 = vpack.c.b16 %v83, %v82
    %v87 = vpack.c.b16 %v84, %v84
    %vm90 = vcmask 326656
    %v92 = vsel %vm90, %v72, 0
    %v95 = vsel %vm90, %v73, 0
    %v98 = vsel %vm90, %v74, 0
    %vm100 = vcmask 1043456
    %v102 = vsel %vm100, %v87, 0
    %104 = vmatpush.bf16.msra.mxu0 0
    %105 = vmatpush.bf16.msra.mxu0 0
    %106 = vmatpush.bf16.msra.mxu0 0
    %107 = vmatpush.bf16.msra.mxu0 0
    %108 = vmatpush.bf16.msra.mxu0 0
    %109 = vmatpush.bf16.msra.mxu0 %v102
    %110 = vmatpush.bf16.msra.mxu0 %v86
    %111 = vmatpush.bf16.msra.mxu0 %v85
    %112 = vmatmul.bf16.gmra.mxu0 %v92
    %v113 = vpop.f32.mrf.mxu0
    %v114 = vadd.f32 %v60, %v113
    %v115 = vpop.f32.mrf.mxu0
    %v116 = vadd.f32 %v60, %v115
    %117 = vmatmul.bf16.gmra.mxu0 %v95
    %v118 = vpop.f32.mrf.mxu0
    %v119 = vadd.f32 %v60, %v118
    %v120 = vpop.f32.mrf.mxu0
    %v121 = vadd.f32 %v60, %v120
    %122 = vmatmul.bf16.gmra.mxu0 %v98
    %v123 = vpop.f32.mrf.mxu0
    %v124 = vadd.f32 %v60, %v123
    %v125 = vpop.f32.mrf.mxu0
    %126 = vdwg.mxu0
    %vm127 = vcmask 588800
    %128 = vst.msk [vmem:[#allocation7] sm:$0xff] %vm127, %v114
    %129 = vst.msk [vmem:[#allocation7 + $0x8] sm:$0xff] %vm127, %v116
    %130 = vst.msk [vmem:[#allocation7 + $0x10] sm:$0xff] %vm127, %v119
    %131 = vst.msk [vmem:[#allocation7 + $0x18] sm:$0xff] %vm127, %v121
    %vm132 = vcmask 585728
    %133 = vst.msk [vmem:[#allocation7 + $0x20] sm:$0x1f] %vm132, %v124
    // Predicated region
    $region22: #{tpu_custom_call.1} parent=1 // pred_check
      _
    $region23: #{tpu_custom_call.1} parent=1 // pred_check_branch
      %135 = sbr.rel (0) target = $region25
    $region24: #{tpu_custom_call.1} parent=1 // pred_region
      %137 = vsyncadd [#allocation4], 0
      %s138 = sshll.u32 [#allocation7], 4
      %s139 = int_to_ptr.vmem [resolvable:$true] %s138
      %s140 = sshll.u32 %s3, 4
      %s141 = int_to_ptr.hbm [resolvable:$true] %s140
      %146 = dma.vmem_to_hbm [thread:$0]  %s139, 640, %s141, [#allocation4], 128, 128, 8
    $region25: #{tpu_custom_call.1} parent=1 // pred_fallthru
      _
    // Predicated region
    $region26: #{tpu_custom_call.1} parent=1 // pred_check
      _
    $region27: #{tpu_custom_call.1} parent=1 // pred_check_branch
      %148 = sbr.rel (0) target = $region29
    $region28: #{tpu_custom_call.1} parent=1 // pred_region
      %150 = dma.done [#allocation4], 640
    $region29: #{tpu_custom_call.1} parent=1 // pred_fallthru
      _
    %151 = vsyncpa [#allocation3], 1
    %152 = vsyncpa [#allocation6], 1
    %153 = vsyncpa [#allocation4], 1

</llo_original>
